<compile_context>
chip_gen: v6e
topology: v6e:2x2x1
jax: 0.10.0
libtpu: 0.0.40
codegen_flags: <defaults>
</compile_context>

<pallas_src>
import jax
import jax.numpy as jnp
from jax.experimental import pallas as pl
from jax.experimental.pallas import tpu as pltpu


def _gmoe_expert_kernel(x_ref, w1_ref, b1_ref, w2_ref, b2_ref, o_ref, acc_ref):
    """One grid step: (expert e, token tile t, hidden tile h).

    hid  = relu(x_tile @ w1[:, h_chunk] + b1[h_chunk])     # [tT, tH], f32
    acc += hid @ w2[h_chunk, :]                            # [tT, D],  f32 (VMEM scratch)
    on last h: out = acc + b2
    """
    h_idx = pl.program_id(2)

    @pl.when(h_idx == 0)
    def _init():
        acc_ref[...] = jnp.zeros_like(acc_ref)

    # fc1 chunk: bf16 MXU inputs, f32 accumulation; bias add + ReLU in f32 (VPU).
    hid = jnp.dot(x_ref[...], w1_ref[...], preferred_element_type=jnp.float32)
    hid = jnp.maximum(hid + b1_ref[...], 0.0)

    # fc2 partial product over this hidden chunk, accumulated in the f32 VMEM scratch.
    acc_ref[...] += jnp.dot(hid.astype(jnp.bfloat16), w2_ref[...],
                            preferred_element_type=jnp.float32)

    @pl.when(h_idx == pl.num_programs(2) - 1)
    def _finalize():
        o_ref[...] = (acc_ref[...] + b2_ref[...]).astype(o_ref.dtype)


def gmoe_expert_forward(x, w1, b1, w2, b2, *, tokens_tile=256, hidden_tile=512):
    """Batched expert MLP: relu(x @ w1 + b1) @ w2 + b2.

    x:  [E, T, D]    w1: [E, D, H]    b1: [E, 1, H]
    w2: [E, H, D]    b2: [E, 1, D]    returns [E, T, D] in x.dtype
    """
    E, T, D = x.shape
    H = w1.shape[-1]
    out_dtype = x.dtype

    tT = min(tokens_tile, T)
    tH = min(hidden_tile, H)
    if (T % tT) or (H % tH):
        # TODO(synk): pad T / H to tile multiples for shapes not divisible by the tiles.
        raise ValueError(f"T={T}, H={H} must be divisible by tiles ({tT}, {tH})")

    # bf16 matmul operands (halves weight DMA bytes, feeds the MXU at bf16 peak);
    # biases stay f32 so bias-add / ReLU / accumulation remain f32.
    x_bf = x.astype(jnp.bfloat16)
    w1_bf = w1.astype(jnp.bfloat16)
    w2_bf = w2.astype(jnp.bfloat16)
    b1_f32 = b1.astype(jnp.float32)
    b2_f32 = b2.astype(jnp.float32)

    # Explicit VMEM budget: ~2x (per-step input tiles + output tile) + accumulator + headroom.
    in_bytes = (tT * D + D * tH + tH * D) * 2 + (tH + D) * 4
    out_bytes = tT * D * jnp.dtype(out_dtype).itemsize
    acc_bytes = tT * D * 4
    vmem_limit = int(min(max(2 * (in_bytes + out_bytes) + acc_bytes + (8 << 20), 16 << 20),
                         64 << 20))

    grid = (E, T // tT, H // tH)

    return pl.pallas_call(
        _gmoe_expert_kernel,
        out_shape=jax.ShapeDtypeStruct((E, T, D), out_dtype),
        grid_spec=pltpu.PrefetchScalarGridSpec(
            num_scalar_prefetch=0,
            grid=grid,
            in_specs=[
                # Expert dim squeezed (None) -> kernel sees 2-D, lane-dense tiles.
                pl.BlockSpec((None, tT, D), lambda e, t, h: (e, t, 0)),   # x tile (resident over h)
                pl.BlockSpec((None, D, tH), lambda e, t, h: (e, 0, h)),   # fc1 weight chunk
                pl.BlockSpec((None, 1, tH), lambda e, t, h: (e, 0, h)),   # fc1 bias chunk
                pl.BlockSpec((None, tH, D), lambda e, t, h: (e, h, 0)),   # fc2 weight chunk
                pl.BlockSpec((None, 1, D), lambda e, t, h: (e, 0, 0)),    # fc2 bias
            ],
            # Output tile's index_map ignores the hidden axis -> stays resident across
            # the reduction; written once on the last hidden step.
            out_specs=pl.BlockSpec((None, tT, D), lambda e, t, h: (e, t, 0)),
            scratch_shapes=[pltpu.VMEM((tT, D), jnp.float32)],
        ),
        compiler_params=pltpu.CompilerParams(
            dimension_semantics=("parallel", "parallel", "arbitrary"),
            vmem_limit_bytes=vmem_limit,
        ),
    )(x_bf, w1_bf, b1_f32, w2_bf, b2_f32)


if __name__ == "__main__":
    # Small but lane-aligned demo shapes (matmul dims are multiples of 128).
    expert_num, tokens, model_dim, hidden_size = 4, 128, 128, 256

    key = jax.random.PRNGKey(0)
    kx, kw1, kw2 = jax.random.split(key, 3)

    # Parameter init mirroring torch.randn(...) * 0.001 and zeros.
    w1 = jax.random.normal(kw1, (expert_num, model_dim, hidden_size), jnp.float32) * 0.001
    w2 = jax.random.normal(kw2, (expert_num, hidden_size, model_dim), jnp.float32) * 0.001
    b1 = jnp.zeros((expert_num, 1, hidden_size), jnp.float32)
    b2 = jnp.zeros((expert_num, 1, model_dim), jnp.float32)
    x = jax.random.normal(kx, (expert_num, tokens, model_dim), jnp.float32)

    # hidden_tile=128 -> two reduction steps, exercising the VMEM accumulator path.
    out = gmoe_expert_forward(x, w1, b1, w2, b2, tokens_tile=128, hidden_tile=128)
    out = jax.block_until_ready(out)
    assert out.shape == (expert_num, tokens, model_dim)

    # Reference 1: mirrors the kernel's bf16-matmul / f32-accumulate numerics.
    h_ref = jnp.matmul(x.astype(jnp.bfloat16), w1.astype(jnp.bfloat16),
                       preferred_element_type=jnp.float32) + b1
    h_ref = jnp.maximum(h_ref, 0.0)
    ref_bf16 = jnp.matmul(h_ref.astype(jnp.bfloat16), w2.astype(jnp.bfloat16),
                          preferred_element_type=jnp.float32) + b2
    assert jnp.allclose(out, ref_bf16, atol=1e-5, rtol=1e-2), \
        float(jnp.max(jnp.abs(out - ref_bf16)))

    # Reference 2: exact f32 PyTorch semantics, checked at bf16-matmul tolerance.
    ref_f32 = jnp.maximum(jnp.matmul(x, w1) + b1, 0.0)
    ref_f32 = jnp.matmul(ref_f32, w2) + b2
    assert jnp.allclose(out, ref_f32, atol=5e-5, rtol=5e-2), \
        float(jnp.max(jnp.abs(out - ref_f32)))

    print("KERNEL_OK")
</pallas_src>

<mosaic_0001>
module attributes {stable_mosaic.version = 11 : i64} {
  func.func @_gmoe_expert_kernel(%arg0: i32, %arg1: i32, %arg2: i32, %arg3: memref<1x128x128xbf16, #tpu.memory_space<vmem>>, %arg4: memref<1x128x128xbf16, #tpu.memory_space<vmem>>, %arg5: memref<1x1x128xf32, #tpu.memory_space<vmem>>, %arg6: memref<1x128x128xbf16, #tpu.memory_space<vmem>>, %arg7: memref<1x1x128xf32, #tpu.memory_space<vmem>>, %arg8: memref<1x128x128xf32, #tpu.memory_space<vmem>>, %arg9: memref<128x128xf32, #tpu.memory_space<vmem>>) attributes {dimension_semantics = [#tpu.dimension_semantics<parallel>, #tpu.dimension_semantics<parallel>, #tpu.dimension_semantics<arbitrary>], iteration_bounds = array<i64: 4, 1, 2>, scalar_prefetch = 0 : i64, scratch_operands = 1 : i64, tpu.core_type = #tpu.core_type<tc>, window_params = [{transform_indices = @transform_0, window_bounds = array<i64: 1, 128, 128>}, {transform_indices = @transform_1, window_bounds = array<i64: 1, 128, 128>}, {transform_indices = @transform_2, window_bounds = array<i64: 1, 1, 128>}, {transform_indices = @transform_3, window_bounds = array<i64: 1, 128, 128>}, {transform_indices = @transform_4, window_bounds = array<i64: 1, 1, 128>}, {transform_indices = @transform_5, window_bounds = array<i64: 1, 128, 128>}]} {
    %c0_i32 = arith.constant 0 : i32
    %0 = arith.cmpi eq, %arg2, %c0_i32 : i32
    %1 = arith.extui %0 : i1 to i32
    %c0_i32_0 = arith.constant 0 : i32
    %2 = arith.cmpi ne, %1, %c0_i32_0 : i32
    scf.if %2 {
      %cst_19 = arith.constant 0.000000e+00 : f32
      %24 = vector.broadcast %cst_19 : f32 to vector<128x128xf32>
      %c0_20 = arith.constant 0 : index
      %c0_21 = arith.constant 0 : index
      %25 = vector.load %arg9[%c0_20, %c0_21] : memref<128x128xf32, #tpu.memory_space<vmem>>, vector<128x128xf32>
      tpu.vector_store %arg9[%c0_20, %c0_21], %24 {strides = array<i32>} : memref<128x128xf32, #tpu.memory_space<vmem>>, vector<128x128xf32>,
    } else {
    }
    %c0 = arith.constant 0 : index
    %c0_1 = arith.constant 0 : index
    %c0_2 = arith.constant 0 : index
    %3 = vector.load %arg3[%c0, %c0_1, %c0_2] : memref<1x128x128xbf16, #tpu.memory_space<vmem>>, vector<1x128x128xbf16>
    %4 = vector.shape_cast %3 : vector<1x128x128xbf16> to vector<128x128xbf16>
    %c0_3 = arith.constant 0 : index
    %c0_4 = arith.constant 0 : index
    %c0_5 = arith.constant 0 : index
    %5 = vector.load %arg4[%c0_3, %c0_4, %c0_5] : memref<1x128x128xbf16, #tpu.memory_space<vmem>>, vector<1x128x128xbf16>
    %6 = vector.shape_cast %5 : vector<1x128x128xbf16> to vector<128x128xbf16>
    %cst = arith.constant dense<0.000000e+00> : vector<128x128xf32>
    %7 = tpu.matmul %4, %6, %cst {dimension_numbers = #tpu.dot_dimension_numbers<[1], [0], [0], [1], [0, 0, 1, 1], [], []>} : vector<128x128xbf16>, vector<128x128xbf16>, vector<128x128xf32> -> vector<128x128xf32>
    %c0_6 = arith.constant 0 : index
    %c0_7 = arith.constant 0 : index
    %c0_8 = arith.constant 0 : index
    %8 = vector.load %arg5[%c0_6, %c0_7, %c0_8] : memref<1x1x128xf32, #tpu.memory_space<vmem>>, vector<1x1x128xf32>
    %9 = vector.shape_cast %8 : vector<1x1x128xf32> to vector<1x128xf32>
    %10 = vector.broadcast %9 : vector<1x128xf32> to vector<128x128xf32>
    %11 = arith.addf %7, %10 : vector<128x128xf32>
    %cst_9 = arith.constant 0.000000e+00 : f32
    %12 = vector.broadcast %cst_9 : f32 to vector<128x128xf32>
    %13 = arith.maximumf %11, %12 : vector<128x128xf32>
    %c0_10 = arith.constant 0 : index
    %c0_11 = arith.constant 0 : index
    %14 = vector.load %arg9[%c0_10, %c0_11] : memref<128x128xf32, #tpu.memory_space<vmem>>, vector<128x128xf32>
    %15 = arith.truncf %13 : vector<128x128xf32> to vector<128x128xbf16>
    %c0_12 = arith.constant 0 : index
    %c0_13 = arith.constant 0 : index
    %c0_14 = arith.constant 0 : index
    %16 = vector.load %arg6[%c0_12, %c0_13, %c0_14] : memref<1x128x128xbf16, #tpu.memory_space<vmem>>, vector<1x128x128xbf16>
    %17 = vector.shape_cast %16 : vector<1x128x128xbf16> to vector<128x128xbf16>
    %cst_15 = arith.constant dense<0.000000e+00> : vector<128x128xf32>
    %18 = tpu.matmul %15, %17, %cst_15 {dimension_numbers = #tpu.dot_dimension_numbers<[1], [0], [0], [1], [0, 0, 1, 1], [], []>} : vector<128x128xbf16>, vector<128x128xbf16>, vector<128x128xf32> -> vector<128x128xf32>
    %19 = arith.addf %14, %18 : vector<128x128xf32>
    %c0_16 = arith.constant 0 : index
    %c0_17 = arith.constant 0 : index
    %20 = vector.load %arg9[%c0_16, %c0_17] : memref<128x128xf32, #tpu.memory_space<vmem>>, vector<128x128xf32>
    tpu.vector_store %arg9[%c0_16, %c0_17], %19 {strides = array<i32>} : memref<128x128xf32, #tpu.memory_space<vmem>>, vector<128x128xf32>,
    %c1_i32 = arith.constant 1 : i32
    %21 = arith.cmpi eq, %arg2, %c1_i32 : i32
    %22 = arith.extui %21 : i1 to i32
    %c0_i32_18 = arith.constant 0 : i32
    %23 = arith.cmpi ne, %22, %c0_i32_18 : i32
    scf.if %23 {
      %c0_19 = arith.constant 0 : index
      %c0_20 = arith.constant 0 : index
      %24 = vector.load %arg9[%c0_19, %c0_20] : memref<128x128xf32, #tpu.memory_space<vmem>>, vector<128x128xf32>
      %c0_21 = arith.constant 0 : index
      %c0_22 = arith.constant 0 : index
      %c0_23 = arith.constant 0 : index
      %25 = vector.load %arg7[%c0_21, %c0_22, %c0_23] : memref<1x1x128xf32, #tpu.memory_space<vmem>>, vector<1x1x128xf32>
      %26 = vector.shape_cast %25 : vector<1x1x128xf32> to vector<1x128xf32>
      %27 = vector.broadcast %26 : vector<1x128xf32> to vector<128x128xf32>
      %28 = arith.addf %24, %27 : vector<128x128xf32>
      %c0_24 = arith.constant 0 : index
      %c0_25 = arith.constant 0 : index
      %c0_26 = arith.constant 0 : index
      %29 = vector.load %arg8[%c0_24, %c0_25, %c0_26] : memref<1x128x128xf32, #tpu.memory_space<vmem>>, vector<1x128x128xf32>
      %30 = vector.shape_cast %29 : vector<1x128x128xf32> to vector<128x128xf32>
      %31 = vector.shape_cast %28 : vector<128x128xf32> to vector<1x128x128xf32>
      tpu.vector_store %arg8[%c0_24, %c0_25, %c0_26], %31 {strides = array<i32>} : memref<1x128x128xf32, #tpu.memory_space<vmem>>, vector<1x128x128xf32>,
    } else {
    }
    return
  }
  func.func @transform_0(%arg0: i32, %arg1: i32, %arg2: i32) -> (i32, i32, i32) {
    %c0_i32 = arith.constant 0 : i32
    %c0_i32_0 = arith.constant 0 : i32
    return %arg0, %arg1, %c0_i32 : i32, i32, i32
  }
  func.func @transform_1(%arg0: i32, %arg1: i32, %arg2: i32) -> (i32, i32, i32) {
    %c0_i32 = arith.constant 0 : i32
    %c0_i32_0 = arith.constant 0 : i32
    return %arg0, %c0_i32, %arg2 : i32, i32, i32
  }
  func.func @transform_2(%arg0: i32, %arg1: i32, %arg2: i32) -> (i32, i32, i32) {
    %c0_i32 = arith.constant 0 : i32
    %c0_i32_0 = arith.constant 0 : i32
    return %arg0, %c0_i32, %arg2 : i32, i32, i32
  }
  func.func @transform_3(%arg0: i32, %arg1: i32, %arg2: i32) -> (i32, i32, i32) {
    %c0_i32 = arith.constant 0 : i32
    %c0_i32_0 = arith.constant 0 : i32
    return %arg0, %arg2, %c0_i32 : i32, i32, i32
  }
  func.func @transform_4(%arg0: i32, %arg1: i32, %arg2: i32) -> (i32, i32, i32) {
    %c0_i32 = arith.constant 0 : i32
    %c0_i32_0 = arith.constant 0 : i32
    %c0_i32_1 = arith.constant 0 : i32
    return %arg0, %c0_i32, %c0_i32_0 : i32, i32, i32
  }
  func.func @transform_5(%arg0: i32, %arg1: i32, %arg2: i32) -> (i32, i32, i32) {
    %c0_i32 = arith.constant 0 : i32
    %c0_i32_0 = arith.constant 0 : i32
    return %arg0, %arg1, %c0_i32 : i32, i32, i32
  }
}

</mosaic_0001>

<llo_original>
// kernel: tpu_custom_call.1
$region0: #{tpu_custom_call.1}
  #allocation0 [shape = 'u32[]', space=smem, size = 0x4, offset = 0x4, fixed_abs, tag = 'smem constant byte address 0x4 - core index']
  #allocation1 [shape = 'u32[144,128]{1,0:T(1,128)}', space=vmem, size = 0x12000, scoped, tag = 'internal scratch']
  #allocation2 [shape = 'f32[128,128]{1,0:T(8,128)}', space=vmem, size = 0x10000, scoped, tag = 'scratch operand']
  %s0 = inlined_call_operand.hbm [shape: bf16[4,128,128], index: 0, kind: input, shape index: {}]
  %s1 = inlined_call_operand.hbm [shape: bf16[4,128,256], index: 1, kind: input, shape index: {}]
  %s2 = inlined_call_operand.hbm [shape: f32[4,1,256], index: 2, kind: input, shape index: {}]
  %s3 = inlined_call_operand.hbm [shape: bf16[4,256,128], index: 3, kind: input, shape index: {}]
  %s4 = inlined_call_operand.vmem [shape: f32[4,1,128], index: 4, kind: input, shape index: {}]
  %s5 = inlined_call_operand.hbm [shape: f32[4,128,128], index: 5, kind: output, shape index: {}]
  %s6 = sld [smem:[#allocation0]]
  $region77: #{tpu_custom_call.1} parent=0
    _
  %s8 = ssub.s32 1, %s6
  %s9 = scalar_select 0, %s8, %s6
  $region1: #{tpu_custom_call.1} parent=0
    #allocation3 [shape = 'u8[65536]{0}', space=vmem, size = 0x10000, scoped, tag = 'input window, operand 0']
    #allocation4 [shape = 's32[2]{0}', space=sflag, size = 0x8, scoped, tag = 'scoped memory for tpu_custom_call.1']
    #allocation5 [shape = 's32[2]{0}', space=sflag, size = 0x8, scoped, tag = 'scoped memory for tpu_custom_call.1']
    #allocation6 [shape = 'u8[65536]{0}', space=vmem, size = 0x10000, scoped, tag = 'input window, operand 1']
    #allocation7 [shape = 's32[2]{0}', space=sflag, size = 0x8, scoped, tag = 'scoped memory for tpu_custom_call.1']
    #allocation8 [shape = 'u8[1024]{0}', space=vmem, size = 0x400, scoped, tag = 'input window, operand 2']
    #allocation9 [shape = 'u8[65536]{0}', space=vmem, size = 0x10000, scoped, tag = 'input window, operand 3']
    #allocation10 [shape = 's32[2]{0}', space=sflag, size = 0x8, scoped, tag = 'scoped memory for tpu_custom_call.1']
    #allocation11 [shape = 'u8[131072]{0}', space=vmem, size = 0x20000, scoped, tag = 'output window, operand 0']
    %10 = vsyncpa [#allocation4], 0
    %s11 = scalar_lea.sflag [#allocation4], 1
    %12 = vsyncpa %s11, 0
    %13 = vsyncpa [#allocation7], 0
    %s14 = scalar_lea.sflag [#allocation7], 1
    %15 = vsyncpa %s14, 0
    %16 = vsyncpa [#allocation10], 0
    %s17 = scalar_lea.sflag [#allocation10], 1
    %18 = vsyncpa %s17, 0
    %19 = vsyncpa [#allocation5], 0
    %s20 = scalar_lea.sflag [#allocation5], 1
    %21 = vsyncpa %s20, 0
    loop: start=0, step=1, limit=10
    $region2: #{tpu_custom_call.1} parent=1 // loop_pre_header
      _
    $region3: #{tpu_custom_call.1} parent=1 // loop_header
      %s23 = sphi 0, %s27
      %p24 = scmp.ge.s32.totalorder %s23, 10
      %s30 = sphi 0, %s49
      %s31 = sphi 0, %s45
      %s32 = sphi 0, %s41
      %s33 = sphi 0, %s30
      %s34 = sphi 0, %s31
      %s35 = sphi 0, %s32
      %s36 = sphi 0, %s33
      %s37 = sphi 0, %s34
      %s38 = sphi 0, %s35
      %s54 = sphi 0, %s56
      %s57 = sphi 0, %s54
      %s58 = sphi 0, %s57
      %s74 = sphi 0, %s58
      %s82 = sphi 0, %s84
      %s85 = sphi 0, %s82
      %s86 = sphi 0, %s85
      %s102 = sphi 0, %s86
      %s110 = sphi 0, %s112
      %s113 = sphi 0, %s110
      %s114 = sphi 0, %s113
      %s130 = sphi 0, %s114
      %s138 = sphi 0, %s140
      %s141 = sphi 0, %s138
      %s142 = sphi 0, %s141
      %s158 = sphi 0, %s142
      %s164 = sphi 0, %s166
      %s167 = sphi 0, %s164
      %s168 = sphi 0, %s167
      %s184 = sphi 0, %s168
      %s192 = sphi 0, %s194
      %s195 = sphi 0, %s192
      %s196 = sphi 0, %s195
      %s212 = sphi 0, %s196
    $region4: #{tpu_custom_call.1} parent=1 // loop_header_branch
      %26 = sbr.rel (%p24) target = $region8
    $region5: #{tpu_custom_call.1} parent=1 // loop_body
      %s28 = ssub.s32 %s23, 1
      %s29 = ssub.s32 %s23, 2
      %s39 = sadd.s32 1, %s32
      %p40 = scmp.ge.s32.totalorder %s39, 2
      %s41 = scalar_select %p40, 0, %s39
      %s42 = sadd.s32 1, %s31
      %s43 = scalar_select %p40, %s42, %s31
      %p44 = scmp.ge.s32.totalorder %s43, 1
      %s45 = scalar_select %p44, 0, %s43
      %s46 = sadd.s32 1, %s30
      %s47 = scalar_select %p44, %s46, %s30
      %p48 = scmp.ge.s32.totalorder %s47, 4
      %s49 = scalar_select %p48, 0, %s47
      %s50 = ssub.s32 %s30, %s49
      %s51 = ssub.s32 %s31, %s45
      %s52 = sor.u32 %s50, %s51
      %p53 = scmp.eq.s32.totalorder %s52, 0
      %s55 = sadd.s32 %s54, 1
      %s56 = scalar_select %p53, %s54, %s55
      %p59 = pneg %p53
      %p60 = scmp.eq.s32.totalorder %s23, 7
      %p61 = por %p59, %p60
      %p62 = scmp.ne.s32.totalorder %s54, %s57
      %p63 = scmp.eq.s32.totalorder %s23, 0
      %p64 = por %p62, %p63
      %p65 = scmp.ne.s32.totalorder %s54, %s57
      %p66 = scmp.eq.s32.totalorder %s28, 7
      %p67 = por %p65, %p66
      %p68 = scmp.ne.s32.totalorder %s57, %s58
      %p69 = scmp.eq.s32.totalorder %s28, 0
      %p70 = por %p68, %p69
      %p71 = scmp.ne.s32.totalorder %s57, %s58
      %p72 = scmp.eq.s32.totalorder %s29, 7
      %p73 = por %p71, %p72
      %p75 = scmp.ne.s32.totalorder %s58, %s74
      %p76 = scmp.eq.s32.totalorder %s29, 0
      %p77 = por %p75, %p76
      %s78 = ssub.s32 %s30, %s49
      %s79 = ssub.s32 %s32, %s41
      %s80 = sor.u32 %s78, %s79
      %p81 = scmp.eq.s32.totalorder %s80, 0
      %s83 = sadd.s32 %s82, 1
      %s84 = scalar_select %p81, %s82, %s83
      %p87 = pneg %p81
      %p88 = scmp.eq.s32.totalorder %s23, 7
      %p89 = por %p87, %p88
      %p90 = scmp.ne.s32.totalorder %s82, %s85
      %p91 = scmp.eq.s32.totalorder %s23, 0
      %p92 = por %p90, %p91
      %p93 = scmp.ne.s32.totalorder %s82, %s85
      %p94 = scmp.eq.s32.totalorder %s28, 7
      %p95 = por %p93, %p94
      %p96 = scmp.ne.s32.totalorder %s85, %s86
      %p97 = scmp.eq.s32.totalorder %s28, 0
      %p98 = por %p96, %p97
      %p99 = scmp.ne.s32.totalorder %s85, %s86
      %p100 = scmp.eq.s32.totalorder %s29, 7
      %p101 = por %p99, %p100
      %p103 = scmp.ne.s32.totalorder %s86, %s102
      %p104 = scmp.eq.s32.totalorder %s29, 0
      %p105 = por %p103, %p104
      %s106 = ssub.s32 %s30, %s49
      %s107 = ssub.s32 %s32, %s41
      %s108 = sor.u32 %s106, %s107
      %p109 = scmp.eq.s32.totalorder %s108, 0
      %s111 = sadd.s32 %s110, 1
      %s112 = scalar_select %p109, %s110, %s111
      %p115 = pneg %p109
      %p116 = scmp.eq.s32.totalorder %s23, 7
      %p117 = por %p115, %p116
      %p118 = scmp.ne.s32.totalorder %s110, %s113
      %p119 = scmp.eq.s32.totalorder %s23, 0
      %p120 = por %p118, %p119
      %p121 = scmp.ne.s32.totalorder %s110, %s113
      %p122 = scmp.eq.s32.totalorder %s28, 7
      %p123 = por %p121, %p122
      %p124 = scmp.ne.s32.totalorder %s113, %s114
      %p125 = scmp.eq.s32.totalorder %s28, 0
      %p126 = por %p124, %p125
      %p127 = scmp.ne.s32.totalorder %s113, %s114
      %p128 = scmp.eq.s32.totalorder %s29, 7
      %p129 = por %p127, %p128
      %p131 = scmp.ne.s32.totalorder %s114, %s130
      %p132 = scmp.eq.s32.totalorder %s29, 0
      %p133 = por %p131, %p132
      %s134 = ssub.s32 %s30, %s49
      %s135 = ssub.s32 %s32, %s41
      %s136 = sor.u32 %s134, %s135
      %p137 = scmp.eq.s32.totalorder %s136, 0
      %s139 = sadd.s32 %s138, 1
      %s140 = scalar_select %p137, %s138, %s139
      %p143 = pneg %p137
      %p144 = scmp.eq.s32.totalorder %s23, 7
      %p145 = por %p143, %p144
      %p146 = scmp.ne.s32.totalorder %s138, %s141
      %p147 = scmp.eq.s32.totalorder %s23, 0
      %p148 = por %p146, %p147
      %p149 = scmp.ne.s32.totalorder %s138, %s141
      %p150 = scmp.eq.s32.totalorder %s28, 7
      %p151 = por %p149, %p150
      %p152 = scmp.ne.s32.totalorder %s141, %s142
      %p153 = scmp.eq.s32.totalorder %s28, 0
      %p154 = por %p152, %p153
      %p155 = scmp.ne.s32.totalorder %s141, %s142
      %p156 = scmp.eq.s32.totalorder %s29, 7
      %p157 = por %p155, %p156
      %p159 = scmp.ne.s32.totalorder %s142, %s158
      %p160 = scmp.eq.s32.totalorder %s29, 0
      %p161 = por %p159, %p160
      %s162 = ssub.s32 %s30, %s49
      %p163 = scmp.eq.s32.totalorder %s162, 0
      %s165 = sadd.s32 %s164, 1
      %s166 = scalar_select %p163, %s164, %s165
      %p169 = pneg %p163
      %p170 = scmp.eq.s32.totalorder %s23, 7
      %p171 = por %p169, %p170
      %p172 = scmp.ne.s32.totalorder %s164, %s167
      %p173 = scmp.eq.s32.totalorder %s23, 0
      %p174 = por %p172, %p173
      %p175 = scmp.ne.s32.totalorder %s164, %s167
      %p176 = scmp.eq.s32.totalorder %s28, 7
      %p177 = por %p175, %p176
      %p178 = scmp.ne.s32.totalorder %s167, %s168
      %p179 = scmp.eq.s32.totalorder %s28, 0
      %p180 = por %p178, %p179
      %p181 = scmp.ne.s32.totalorder %s167, %s168
      %p182 = scmp.eq.s32.totalorder %s29, 7
      %p183 = por %p181, %p182
      %p185 = scmp.ne.s32.totalorder %s168, %s184
      %p186 = scmp.eq.s32.totalorder %s29, 0
      %p187 = por %p185, %p186
      %s188 = ssub.s32 %s30, %s49
      %s189 = ssub.s32 %s31, %s45
      %s190 = sor.u32 %s188, %s189
      %p191 = scmp.eq.s32.totalorder %s190, 0
      %s193 = sadd.s32 %s192, 1
      %s194 = scalar_select %p191, %s192, %s193
      %p197 = pneg %p191
      %p198 = scmp.eq.s32.totalorder %s23, 7
      %p199 = por %p197, %p198
      %p200 = scmp.ne.s32.totalorder %s192, %s195
      %p201 = scmp.eq.s32.totalorder %s23, 0
      %p202 = por %p200, %p201
      %p203 = scmp.ne.s32.totalorder %s192, %s195
      %p204 = scmp.eq.s32.totalorder %s28, 7
      %p205 = por %p203, %p204
      %p206 = scmp.ne.s32.totalorder %s195, %s196
      %p207 = scmp.eq.s32.totalorder %s28, 0
      %p208 = por %p206, %p207
      %p209 = scmp.ne.s32.totalorder %s195, %s196
      %p210 = scmp.eq.s32.totalorder %s29, 7
      %p211 = por %p209, %p210
      %p213 = scmp.ne.s32.totalorder %s196, %s212
      %p214 = scmp.eq.s32.totalorder %s29, 0
      %p215 = por %p213, %p214
      %p216 = scmp.le.s32.totalorder 1, %s23
      %p217 = scmp.lt.s32.totalorder %s23, 9
      %p218 = pnand %p216, %p217
      %p219 = pneg %p218
      // Predicated region
      $region9: #{tpu_custom_call.1} parent=5 // pred_check
        _
      $region10: #{tpu_custom_call.1} parent=5 // pred_check_branch
        %221 = sbr.rel (%p218) target = $region12
      $region11: #{tpu_custom_call.1} parent=5 // pred_region
        %s222 = ssub.s32 %s23, 1
      $region12: #{tpu_custom_call.1} parent=5 // pred_fallthru
        _
      %p223 = scmp.lt.s32.totalorder %s23, 8
      // Predicated region
      $region13: #{tpu_custom_call.1} parent=5 // pred_check
        %p224 = pneg %p223
      $region14: #{tpu_custom_call.1} parent=5 // pred_check_branch
        %226 = sbr.rel (%p224) target = $region16
      $region15: #{tpu_custom_call.1} parent=5 // pred_region
        // Predicated region
        $region17: #{tpu_custom_call.1} parent=15 // pred_check
          %p227 = pneg %p64
        $region18: #{tpu_custom_call.1} parent=15 // pred_check_branch
          %229 = sbr.rel (%p227) target = $region20
        $region19: #{tpu_custom_call.1} parent=15 // pred_region
          %s230 = sand.u32 %s54, 1
          %s231 = scalar_lea.sflag [#allocation4], %s230
          %s232 = sand.u32 %s54, 1
          %s233 = smul.addr %s232, 64
          %s234 = scalar_lea.vmem [#allocation3], %s233
          %s235 = smul.u32 16, %s31
          %s237 = ssub.s32 1024, 1024
          %238 = vsyncadd %s231, %s237
          %s239 = smul.addr %s30, 16
          %s240 = sadd.s32 %s235, %s239
          %s241 = smul.addr %s240, 64
          %s242 = scalar_lea.hbm %s0, %s241
          %s243 = sshll.u32 %s234, 4
          %s244 = int_to_ptr.vmem [resolvable:$true] %s243
          %249 = dma.hbm_to_vmem [thread:$0]  %s242, 1024, %s244, %s231, 64, 64, 4
        $region20: #{tpu_custom_call.1} parent=15 // pred_fallthru
          _
        // Predicated region
        $region21: #{tpu_custom_call.1} parent=15 // pred_check
          %p250 = pneg %p92
        $region22: #{tpu_custom_call.1} parent=15 // pred_check_branch
          %252 = sbr.rel (%p250) target = $region24
        $region23: #{tpu_custom_call.1} parent=15 // pred_region
          %s253 = sand.u32 %s23, 1
          %s254 = scalar_lea.sflag [#allocation7], %s253
          %s255 = sand.u32 %s82, 1
          %s256 = smul.addr %s255, 64
          %s257 = scalar_lea.vmem [#allocation6], %s256
          %s259 = ssub.s32 1024, 1024
          %260 = vsyncadd %s254, %s259
          %s261 = smul.addr %s30, 32
          %s262 = sadd.s32 %s32, %s261
          %s263 = smul.addr %s262, 64
          %s264 = scalar_lea.hbm %s1, %s263
          %s265 = sshll.u32 %s257, 4
          %s266 = int_to_ptr.vmem [resolvable:$true] %s265
          %271 = dma.hbm_to_vmem [thread:$0]  %s264, 1024, %s266, %s254, 128, 64, 4
        $region24: #{tpu_custom_call.1} parent=15 // pred_fallthru
          _
        // Predicated region
        $region25: #{tpu_custom_call.1} parent=15 // pred_check
          %p272 = pneg %p120
        $region26: #{tpu_custom_call.1} parent=15 // pred_check_branch
          %274 = sbr.rel (%p272) target = $region28
        $region27: #{tpu_custom_call.1} parent=15 // pred_region
          %s275 = sand.u32 %s23, 1
          %s276 = scalar_lea.sflag [#allocation7], %s275
          %s277 = sand.u32 %s110, 1
          %s278 = scalar_lea.vmem [#allocation8], %s277
          %s280 = ssub.s32 16, 16
          %281 = vsyncadd %s276, %s280
          %s282 = smul.addr %s30, 2
          %s283 = sadd.s32 %s32, %s282
          %s284 = smul.addr %s283, 16
          %s285 = scalar_lea.hbm %s2, %s284
          %s287 = sshll.u32 %s278, 4
          %s288 = int_to_ptr.vmem [resolvable:$true] %s287
          %290 = dma.hbm_to_vmem [thread:$0]  %s285, 16, %s288, %s276
        $region28: #{tpu_custom_call.1} parent=15 // pred_fallthru
          _
        // Predicated region
        $region29: #{tpu_custom_call.1} parent=15 // pred_check
          %p291 = pneg %p148
        $region30: #{tpu_custom_call.1} parent=15 // pred_check_branch
          %293 = sbr.rel (%p291) target = $region32
        $region31: #{tpu_custom_call.1} parent=15 // pred_region
          %s294 = sand.u32 %s138, 1
          %s295 = scalar_lea.sflag [#allocation10], %s294
          %s296 = sand.u32 %s138, 1
          %s297 = smul.addr %s296, 64
          %s298 = scalar_lea.vmem [#allocation9], %s297
          %s299 = smul.u32 16, %s32
          %s301 = ssub.s32 1024, 1024
          %302 = vsyncadd %s295, %s301
          %s303 = smul.addr %s30, 32
          %s304 = sadd.s32 %s299, %s303
          %s305 = smul.addr %s304, 64
          %s306 = scalar_lea.hbm %s3, %s305
          %s307 = sshll.u32 %s298, 4
          %s308 = int_to_ptr.vmem [resolvable:$true] %s307
          %313 = dma.hbm_to_vmem [thread:$0]  %s306, 1024, %s308, %s295, 64, 64, 4
        $region32: #{tpu_custom_call.1} parent=15 // pred_fallthru
          _
        // Predicated region
        $region33: #{tpu_custom_call.1} parent=15 // pred_check
          %p314 = pneg %p174
        $region34: #{tpu_custom_call.1} parent=15 // pred_check_branch
          %316 = sbr.rel (%p314) target = $region36
        $region35: #{tpu_custom_call.1} parent=15 // pred_region
          %p317 = scmp.lt.s32.totalorder %s30, 3
          %s318 = scalar_select %p317, %s30, 3
          %s319 = scalar_lea.vmem %s4, %s318
        $region36: #{tpu_custom_call.1} parent=15 // pred_fallthru
          _
      $region16: #{tpu_custom_call.1} parent=5 // pred_fallthru
        _
      %p320 = scmp.le.s32.totalorder 1, %s23
      %p321 = scmp.lt.s32.totalorder %s23, 9
      %p322 = pnand %p320, %p321
      %p323 = pneg %p322
      // Predicated region
      $region37: #{tpu_custom_call.1} parent=5 // pred_check
        _
      $region38: #{tpu_custom_call.1} parent=5 // pred_check_branch
        %325 = sbr.rel (%p322) target = $region40
      $region39: #{tpu_custom_call.1} parent=5 // pred_region
        %s326 = ssub.s32 %s23, 1
        %s327 = sand.u32 %s57, 1
        %s328 = scalar_lea.sflag [#allocation4], %s327
        %s329 = sand.u32 %s57, 1
        %s330 = smul.addr %s329, 64
        %s331 = scalar_lea.vmem [#allocation3], %s330
        // Predicated region
        $region41: #{tpu_custom_call.1} parent=39 // pred_check
          %p332 = pneg %p70
        $region42: #{tpu_custom_call.1} parent=39 // pred_check_branch
          %334 = sbr.rel (%p332) target = $region44
        $region43: #{tpu_custom_call.1} parent=39 // pred_region
          %335 = dma.done %s328, 1024
        $region44: #{tpu_custom_call.1} parent=39 // pred_fallthru
          _
        %s336 = sand.u32 %s28, 1
        %s337 = scalar_lea.sflag [#allocation7], %s336
        %s338 = sand.u32 %s85, 1
        %s339 = smul.addr %s338, 64
        %s340 = scalar_lea.vmem [#allocation6], %s339
        // Predicated region
        $region45: #{tpu_custom_call.1} parent=39 // pred_check
          %p341 = pneg %p98
        $region46: #{tpu_custom_call.1} parent=39 // pred_check_branch
          %343 = sbr.rel (%p341) target = $region48
        $region47: #{tpu_custom_call.1} parent=39 // pred_region
          %344 = dma.done %s337, 1024
        $region48: #{tpu_custom_call.1} parent=39 // pred_fallthru
          _
        %s345 = sand.u32 %s28, 1
        %s346 = scalar_lea.sflag [#allocation7], %s345
        %s347 = sand.u32 %s113, 1
        %s348 = scalar_lea.vmem [#allocation8], %s347
        // Predicated region
        $region49: #{tpu_custom_call.1} parent=39 // pred_check
          %p349 = pneg %p126
        $region50: #{tpu_custom_call.1} parent=39 // pred_check_branch
          %351 = sbr.rel (%p349) target = $region52
        $region51: #{tpu_custom_call.1} parent=39 // pred_region
          %352 = dma.done %s346, 16
        $region52: #{tpu_custom_call.1} parent=39 // pred_fallthru
          _
        %s353 = sand.u32 %s141, 1
        %s354 = scalar_lea.sflag [#allocation10], %s353
        %s355 = sand.u32 %s141, 1
        %s356 = smul.addr %s355, 64
        %s357 = scalar_lea.vmem [#allocation9], %s356
        // Predicated region
        $region53: #{tpu_custom_call.1} parent=39 // pred_check
          %p358 = pneg %p154
        $region54: #{tpu_custom_call.1} parent=39 // pred_check_branch
          %360 = sbr.rel (%p358) target = $region56
        $region55: #{tpu_custom_call.1} parent=39 // pred_region
          %361 = dma.done %s354, 1024
        $region56: #{tpu_custom_call.1} parent=39 // pred_fallthru
          _
        %s362 = sand.u32 %s57, 1
        %s363 = scalar_lea.sflag [#allocation4], %s362
        %s364 = sand.u32 %s57, 1
        %s365 = smul.addr %s364, 64
        %s366 = scalar_lea.vmem [#allocation3], %s365
        %p367 = pneg %p70
        %p368 = pneg %p67
        %s369 = sand.u32 %s28, 1
        %s370 = scalar_lea.sflag [#allocation7], %s369
        %s371 = sand.u32 %s85, 1
        %s372 = smul.addr %s371, 64
        %s373 = scalar_lea.vmem [#allocation6], %s372
        %p374 = pneg %p98
        %p375 = pneg %p95
        %s376 = sand.u32 %s28, 1
        %s377 = scalar_lea.sflag [#allocation7], %s376
        %s378 = sand.u32 %s113, 1
        %s379 = scalar_lea.vmem [#allocation8], %s378
        %p380 = pneg %p126
        %p381 = pneg %p123
        %s382 = sand.u32 %s141, 1
        %s383 = scalar_lea.sflag [#allocation10], %s382
        %s384 = sand.u32 %s141, 1
        %s385 = smul.addr %s384, 64
        %s386 = scalar_lea.vmem [#allocation9], %s385
        %p387 = pneg %p154
        %p388 = pneg %p151
        %p389 = scmp.lt.s32.totalorder %s33, 3
        %s390 = scalar_select %p389, %s33, 3
        %s391 = scalar_lea.vmem %s4, %s390
        %p392 = pneg %p180
        %p393 = pneg %p177
        %p394 = pneg %p208
        %p395 = pneg %p205
        %s396 = sand.u32 %s195, 1
        %s397 = scalar_lea.sflag [#allocation5], %s396
        %s398 = sand.u32 %s195, 1
        %s399 = smul.addr %s398, 128
        %s400 = scalar_lea.vmem [#allocation11], %s399
        %s401 = smul.u32 16, %s34
        %s402 = smul.u32 16, %s35
        %p403 = scmp.lt.s32.totalorder %s33, 3
        %s404 = scalar_select %p403, %s33, 3
        %s405 = scalar_lea.vmem %s4, %s404
        %s406 = smul.u32 16, %s34
        %p408 = scmp.eq.s32.totalorder %s35, 0
        // Predicated region
        $region57: #{tpu_custom_call.1} parent=39 // pred_check
          %p409 = pneg %p408
        $region58: #{tpu_custom_call.1} parent=39 // pred_check_branch
          %411 = sbr.rel (%p409) target = $region60
        $region59: #{tpu_custom_call.1} parent=39 // pred_region
          %412 = vst [vmem:[#allocation2] sm:$0xff] 0.0
          %413 = vst [vmem:[#allocation2 + $0x8] sm:$0xff] 0.0
          %414 = vst [vmem:[#allocation2 + $0x10] sm:$0xff] 0.0
          %415 = vst [vmem:[#allocation2 + $0x18] sm:$0xff] 0.0
          %416 = vst [vmem:[#allocation2 + $0x20] sm:$0xff] 0.0
          %417 = vst [vmem:[#allocation2 + $0x28] sm:$0xff] 0.0
          %418 = vst [vmem:[#allocation2 + $0x30] sm:$0xff] 0.0
          %419 = vst [vmem:[#allocation2 + $0x38] sm:$0xff] 0.0
          %420 = vst [vmem:[#allocation2 + $0x40] sm:$0xff] 0.0
          %421 = vst [vmem:[#allocation2 + $0x48] sm:$0xff] 0.0
          %422 = vst [vmem:[#allocation2 + $0x50] sm:$0xff] 0.0
          %423 = vst [vmem:[#allocation2 + $0x58] sm:$0xff] 0.0
          %424 = vst [vmem:[#allocation2 + $0x60] sm:$0xff] 0.0
          %425 = vst [vmem:[#allocation2 + $0x68] sm:$0xff] 0.0
          %426 = vst [vmem:[#allocation2 + $0x70] sm:$0xff] 0.0
          %427 = vst [vmem:[#allocation2 + $0x78] sm:$0xff] 0.0
        $region60: #{tpu_custom_call.1} parent=39 // pred_fallthru
          _
        %v428 = vld [vmem:[%s331] sm:$0xf]
        %v429 = vld [vmem:[%s331 + $0x4] sm:$0xf]
        %v430 = vld [vmem:[%s331 + $0x8] sm:$0xf]
        %v431 = vld [vmem:[%s331 + $0xc] sm:$0xf]
        %v432 = vld [vmem:[%s331 + $0x10] sm:$0xf]
        %v433 = vld [vmem:[%s331 + $0x14] sm:$0xf]
        %v434 = vld [vmem:[%s331 + $0x18] sm:$0xf]
        %v435 = vld [vmem:[%s331 + $0x1c] sm:$0xf]
        %v436 = vld [vmem:[%s331 + $0x20] sm:$0xf]
        %v437 = vld [vmem:[%s331 + $0x24] sm:$0xf]
        %v438 = vld [vmem:[%s331 + $0x28] sm:$0xf]
        %v439 = vld [vmem:[%s331 + $0x2c] sm:$0xf]
        %v440 = vld [vmem:[%s331 + $0x30] sm:$0xf]
        %v441 = vld [vmem:[%s331 + $0x34] sm:$0xf]
        %v442 = vld [vmem:[%s331 + $0x38] sm:$0xf]
        %v443 = vld [vmem:[%s331 + $0x3c] sm:$0xf]
        %v444 = vld [vmem:[%s340] sm:$0xf]
        %v445 = vld [vmem:[%s340 + $0x4] sm:$0xf]
        %v446 = vld [vmem:[%s340 + $0x8] sm:$0xf]
        %v447 = vld [vmem:[%s340 + $0xc] sm:$0xf]
        %v448 = vld [vmem:[%s340 + $0x10] sm:$0xf]
        %v449 = vld [vmem:[%s340 + $0x14] sm:$0xf]
        %v450 = vld [vmem:[%s340 + $0x18] sm:$0xf]
        %v451 = vld [vmem:[%s340 + $0x1c] sm:$0xf]
        %v452 = vld [vmem:[%s340 + $0x20] sm:$0xf]
        %v453 = vld [vmem:[%s340 + $0x24] sm:$0xf]
        %v454 = vld [vmem:[%s340 + $0x28] sm:$0xf]
        %v455 = vld [vmem:[%s340 + $0x2c] sm:$0xf]
        %v456 = vld [vmem:[%s340 + $0x30] sm:$0xf]
        %v457 = vld [vmem:[%s340 + $0x34] sm:$0xf]
        %v458 = vld [vmem:[%s340 + $0x38] sm:$0xf]
        %v459 = vld [vmem:[%s340 + $0x3c] sm:$0xf]
        %v460 = vld [vmem:[%s348] sm:$0x1]
        %v462 = vlaneseq
        %v463 = vshrl.u32 %v462, 7
        %v464 = vsub.s32 0, %v463
        %v465 = vrot.slane %v460, %v464
        %v483 = vunpack.c.l.b16 %v428
        %v484 = vunpack.c.l.b16 %v429
        %v485 = vunpack.c.l.b16 %v430
        %v486 = vunpack.c.l.b16 %v431
        %v487 = vunpack.c.l.b16 %v432
        %v488 = vunpack.c.l.b16 %v433
        %v489 = vunpack.c.l.b16 %v434
        %v490 = vunpack.c.l.b16 %v435
        %v491 = vunpack.c.l.b16 %v436
        %v492 = vunpack.c.l.b16 %v437
        %v493 = vunpack.c.l.b16 %v438
        %v494 = vunpack.c.l.b16 %v439
        %v495 = vunpack.c.l.b16 %v440
        %v496 = vunpack.c.l.b16 %v441
        %v497 = vunpack.c.l.b16 %v442
        %v498 = vunpack.c.l.b16 %v443
        %v499 = vpack.c.b16 %v484, %v483
        %v500 = vpack.c.b16 %v486, %v485
        %v501 = vpack.c.b16 %v488, %v487
        %v502 = vpack.c.b16 %v490, %v489
        %v503 = vpack.c.b16 %v492, %v491
        %v504 = vpack.c.b16 %v494, %v493
        %v505 = vpack.c.b16 %v496, %v495
        %v506 = vpack.c.b16 %v498, %v497
        %v531 = vunpack.c.l.b16 %v444
        %v532 = vunpack.c.l.b16 %v445
        %v533 = vunpack.c.l.b16 %v446
        %v534 = vunpack.c.l.b16 %v447
        %v535 = vunpack.c.l.b16 %v448
        %v536 = vunpack.c.l.b16 %v449
        %v537 = vunpack.c.l.b16 %v450
        %v538 = vunpack.c.l.b16 %v451
        %v539 = vunpack.c.l.b16 %v452
        %v540 = vunpack.c.l.b16 %v453
        %v541 = vunpack.c.l.b16 %v454
        %v542 = vunpack.c.l.b16 %v455
        %v543 = vunpack.c.l.b16 %v456
        %v544 = vunpack.c.l.b16 %v457
        %v545 = vunpack.c.l.b16 %v458
        %v546 = vunpack.c.l.b16 %v459
        %v547 = vpack.c.b16 %v532, %v531
        %v548 = vpack.c.b16 %v534, %v533
        %v549 = vpack.c.b16 %v536, %v535
        %v550 = vpack.c.b16 %v538, %v537
        %v551 = vpack.c.b16 %v540, %v539
        %v552 = vpack.c.b16 %v542, %v541
        %v553 = vpack.c.b16 %v544, %v543
        %v554 = vpack.c.b16 %v546, %v545
        %563 = vmatprep.subr.bf16.mxu0 0
        %564 = vmatpush1.bf16.msra.mxu0 %v554
        %565 = vmatprep.subr.bf16.mxu0 0
        %566 = vmatpush1.bf16.msra.mxu0 %v553
        %567 = vmatprep.subr.bf16.mxu0 0
        %568 = vmatpush1.bf16.msra.mxu0 %v552
        %569 = vmatprep.subr.bf16.mxu0 0
        %570 = vmatpush1.bf16.msra.mxu0 %v551
        %571 = vmatprep.subr.bf16.mxu0 0
        %572 = vmatpush1.bf16.msra.mxu0 %v550
        %573 = vmatprep.subr.bf16.mxu0 0
        %574 = vmatpush1.bf16.msra.mxu0 %v549
        %575 = vmatprep.subr.bf16.mxu0 0
        %576 = vmatpush1.bf16.msra.mxu0 %v548
        %577 = vmatprep.subr.bf16.mxu0 0
        %578 = vmatpush1.bf16.msra.mxu0 %v547
        %579 = vmatprep.subr.bf16.mxu0 0
        %580 = vmatpush2.bf16.msra.mxu0 0
        %581 = vmatprep.subr.bf16.mxu0 0
        %582 = vmatpush2.bf16.msra.mxu0 0
        %583 = vmatprep.subr.bf16.mxu0 0
        %584 = vmatpush2.bf16.msra.mxu0 0
        %585 = vmatprep.subr.bf16.mxu0 0
        %586 = vmatpush2.bf16.msra.mxu0 0
        %587 = vmatprep.subr.bf16.mxu0 0
        %588 = vmatpush2.bf16.msra.mxu0 0
        %589 = vmatprep.subr.bf16.mxu0 0
        %590 = vmatpush2.bf16.msra.mxu0 0
        %591 = vmatprep.subr.bf16.mxu0 0
        %592 = vmatpush2.bf16.msra.mxu0 0
        %593 = vmatprep.subr.bf16.mxu0 0
        %594 = vmatpush2.bf16.msra.mxu0 0
        %595 = vmatprep.mubr.bf16.mxu0 0
        %596 = vmatmul.mubr.bf16.gmra.mxu0 %v499
        %v597 = vpop.f32.mrf.mxu0
        %v598 = vadd.f32 %v465, %v597
        %v599 = vpop.f32.mrf.mxu0
        %v600 = vpop.f32.mrf.mxu0
        %v601 = vadd.f32 %v465, %v600
        %v602 = vpop.f32.mrf.mxu0
        %603 = vmatprep.mubr.bf16.mxu0 0
        %604 = vmatmul.mubr.bf16.gmra.mxu0 %v500
        %v605 = vpop.f32.mrf.mxu0
        %v606 = vadd.f32 %v465, %v605
        %v607 = vpop.f32.mrf.mxu0
        %v608 = vpop.f32.mrf.mxu0
        %v609 = vadd.f32 %v465, %v608
        %v610 = vpop.f32.mrf.mxu0
        %611 = vmatprep.mubr.bf16.mxu0 0
        %612 = vmatmul.mubr.bf16.gmra.mxu0 %v501
        %v613 = vpop.f32.mrf.mxu0
        %v614 = vadd.f32 %v465, %v613
        %v615 = vpop.f32.mrf.mxu0
        %v616 = vpop.f32.mrf.mxu0
        %v617 = vadd.f32 %v465, %v616
        %v618 = vpop.f32.mrf.mxu0
        %619 = vmatprep.mubr.bf16.mxu0 0
        %620 = vmatmul.mubr.bf16.gmra.mxu0 %v502
        %v621 = vpop.f32.mrf.mxu0
        %v622 = vadd.f32 %v465, %v621
        %v623 = vpop.f32.mrf.mxu0
        %v624 = vpop.f32.mrf.mxu0
        %v625 = vadd.f32 %v465, %v624
        %v626 = vpop.f32.mrf.mxu0
        %627 = vmatprep.mubr.bf16.mxu0 0
        %628 = vmatmul.mubr.bf16.gmra.mxu0 %v503
        %v629 = vpop.f32.mrf.mxu0
        %v630 = vadd.f32 %v465, %v629
        %v631 = vpop.f32.mrf.mxu0
        %v632 = vpop.f32.mrf.mxu0
        %v633 = vadd.f32 %v465, %v632
        %v634 = vpop.f32.mrf.mxu0
        %635 = vmatprep.mubr.bf16.mxu0 0
        %636 = vmatmul.mubr.bf16.gmra.mxu0 %v504
        %v637 = vpop.f32.mrf.mxu0
        %v638 = vadd.f32 %v465, %v637
        %v639 = vpop.f32.mrf.mxu0
        %v640 = vpop.f32.mrf.mxu0
        %v641 = vadd.f32 %v465, %v640
        %v642 = vpop.f32.mrf.mxu0
        %643 = vmatprep.mubr.bf16.mxu0 0
        %644 = vmatmul.mubr.bf16.gmra.mxu0 %v505
        %v645 = vpop.f32.mrf.mxu0
        %v646 = vadd.f32 %v465, %v645
        %v647 = vpop.f32.mrf.mxu0
        %v648 = vpop.f32.mrf.mxu0
        %v649 = vadd.f32 %v465, %v648
        %v650 = vpop.f32.mrf.mxu0
        %651 = vmatprep.mubr.bf16.mxu0 0
        %652 = vmatmul.mubr.bf16.gmra.mxu0 %v506
        %v653 = vpop.f32.mrf.mxu0
        %v654 = vadd.f32 %v465, %v653
        %v655 = vpop.f32.mrf.mxu0
        %v656 = vpop.f32.mrf.mxu0
        %v657 = vadd.f32 %v465, %v656
        %v658 = vpop.f32.mrf.mxu0
        %659 = vdwg.mxu0
        %v660 = vmax.f32 %v598, 0.0
        %v661 = vmax.f32 %v601, 0.0
        %v662 = vmax.f32 %v606, 0.0
        %v663 = vmax.f32 %v609, 0.0
        %v664 = vmax.f32 %v614, 0.0
        %v665 = vmax.f32 %v617, 0.0
        %v666 = vmax.f32 %v622, 0.0
        %v667 = vmax.f32 %v625, 0.0
        %v668 = vmax.f32 %v630, 0.0
        %v669 = vmax.f32 %v633, 0.0
        %v670 = vmax.f32 %v638, 0.0
        %v671 = vmax.f32 %v641, 0.0
        %v672 = vmax.f32 %v646, 0.0
        %v673 = vmax.f32 %v649, 0.0
        %v674 = vmax.f32 %v654, 0.0
        %v675 = vmax.f32 %v657, 0.0
        %v676 = vld [vmem:[#allocation2] sm:$0xff]
        %v677 = vld [vmem:[#allocation2 + $0x8] sm:$0xff]
        %v678 = vld [vmem:[#allocation2 + $0x10] sm:$0xff]
        %v679 = vld [vmem:[#allocation2 + $0x18] sm:$0xff]
        %v680 = vld [vmem:[#allocation2 + $0x20] sm:$0xff]
        %v681 = vld [vmem:[#allocation2 + $0x28] sm:$0xff]
        %v682 = vld [vmem:[#allocation2 + $0x30] sm:$0xff]
        %v683 = vld [vmem:[#allocation2 + $0x38] sm:$0xff]
        %v684 = vld [vmem:[#allocation2 + $0x40] sm:$0xff]
        %v685 = vld [vmem:[#allocation2 + $0x48] sm:$0xff]
        %v686 = vld [vmem:[#allocation2 + $0x50] sm:$0xff]
        %v687 = vld [vmem:[#allocation2 + $0x58] sm:$0xff]
        %v688 = vld [vmem:[#allocation2 + $0x60] sm:$0xff]
        %v689 = vld [vmem:[#allocation2 + $0x68] sm:$0xff]
        %v690 = vld [vmem:[#allocation2 + $0x70] sm:$0xff]
        %v691 = vld [vmem:[#allocation2 + $0x78] sm:$0xff]
        %v692 = vpack.c.bf16 %v661, %v660
        %v693 = vpack.c.bf16 %v663, %v662
        %v694 = vpack.c.bf16 %v665, %v664
        %v695 = vpack.c.bf16 %v667, %v666
        %v696 = vpack.c.bf16 %v669, %v668
        %v697 = vpack.c.bf16 %v671, %v670
        %v698 = vpack.c.bf16 %v673, %v672
        %v699 = vpack.c.bf16 %v675, %v674
        %v700 = vld [vmem:[%s357] sm:$0xf]
        %v701 = vld [vmem:[%s357 + $0x4] sm:$0xf]
        %v702 = vld [vmem:[%s357 + $0x8] sm:$0xf]
        %v703 = vld [vmem:[%s357 + $0xc] sm:$0xf]
        %v704 = vld [vmem:[%s357 + $0x10] sm:$0xf]
        %v705 = vld [vmem:[%s357 + $0x14] sm:$0xf]
        %v706 = vld [vmem:[%s357 + $0x18] sm:$0xf]
        %v707 = vld [vmem:[%s357 + $0x1c] sm:$0xf]
        %v708 = vld [vmem:[%s357 + $0x20] sm:$0xf]
        %v709 = vld [vmem:[%s357 + $0x24] sm:$0xf]
        %v710 = vld [vmem:[%s357 + $0x28] sm:$0xf]
        %v711 = vld [vmem:[%s357 + $0x2c] sm:$0xf]
        %v712 = vld [vmem:[%s357 + $0x30] sm:$0xf]
        %v713 = vld [vmem:[%s357 + $0x34] sm:$0xf]
        %v714 = vld [vmem:[%s357 + $0x38] sm:$0xf]
        %v715 = vld [vmem:[%s357 + $0x3c] sm:$0xf]
        %v732 = vunpack.c.l.b16 %v700
        %v733 = vunpack.c.l.b16 %v701
        %v734 = vunpack.c.l.b16 %v702
        %v735 = vunpack.c.l.b16 %v703
        %v736 = vunpack.c.l.b16 %v704
        %v737 = vunpack.c.l.b16 %v705
        %v738 = vunpack.c.l.b16 %v706
        %v739 = vunpack.c.l.b16 %v707
        %v740 = vunpack.c.l.b16 %v708
        %v741 = vunpack.c.l.b16 %v709
        %v742 = vunpack.c.l.b16 %v710
        %v743 = vunpack.c.l.b16 %v711
        %v744 = vunpack.c.l.b16 %v712
        %v745 = vunpack.c.l.b16 %v713
        %v746 = vunpack.c.l.b16 %v714
        %v747 = vunpack.c.l.b16 %v715
        %v748 = vpack.c.b16 %v733, %v732
        %v749 = vpack.c.b16 %v735, %v734
        %v750 = vpack.c.b16 %v737, %v736
        %v751 = vpack.c.b16 %v739, %v738
        %v752 = vpack.c.b16 %v741, %v740
        %v753 = vpack.c.b16 %v743, %v742
        %v754 = vpack.c.b16 %v745, %v744
        %v755 = vpack.c.b16 %v747, %v746
        %764 = vmatprep.subr.bf16.mxu0 0
        %765 = vmatpush1.bf16.msra.mxu0 %v755
        %766 = vmatprep.subr.bf16.mxu0 0
        %767 = vmatpush1.bf16.msra.mxu0 %v754
        %768 = vmatprep.subr.bf16.mxu0 0
        %769 = vmatpush1.bf16.msra.mxu0 %v753
        %770 = vmatprep.subr.bf16.mxu0 0
        %771 = vmatpush1.bf16.msra.mxu0 %v752
        %772 = vmatprep.subr.bf16.mxu0 0
        %773 = vmatpush1.bf16.msra.mxu0 %v751
        %774 = vmatprep.subr.bf16.mxu0 0
        %775 = vmatpush1.bf16.msra.mxu0 %v750
        %776 = vmatprep.subr.bf16.mxu0 0
        %777 = vmatpush1.bf16.msra.mxu0 %v749
        %778 = vmatprep.subr.bf16.mxu0 0
        %779 = vmatpush1.bf16.msra.mxu0 %v748
        %780 = vmatprep.subr.bf16.mxu0 0
        %781 = vmatpush2.bf16.msra.mxu0 0
        %782 = vmatprep.subr.bf16.mxu0 0
        %783 = vmatpush2.bf16.msra.mxu0 0
        %784 = vmatprep.subr.bf16.mxu0 0
        %785 = vmatpush2.bf16.msra.mxu0 0
        %786 = vmatprep.subr.bf16.mxu0 0
        %787 = vmatpush2.bf16.msra.mxu0 0
        %788 = vmatprep.subr.bf16.mxu0 0
        %789 = vmatpush2.bf16.msra.mxu0 0
        %790 = vmatprep.subr.bf16.mxu0 0
        %791 = vmatpush2.bf16.msra.mxu0 0
        %792 = vmatprep.subr.bf16.mxu0 0
        %793 = vmatpush2.bf16.msra.mxu0 0
        %794 = vmatprep.subr.bf16.mxu0 0
        %795 = vmatpush2.bf16.msra.mxu0 0
        %796 = vmatprep.mubr.bf16.mxu0 0
        %797 = vmatmul.mubr.bf16.gmra.mxu0 %v692
        %v798 = vpop.f32.mrf.mxu0
        %v799 = vadd.f32 0.0, %v798
        %v800 = vpop.f32.mrf.mxu0
        %v801 = vpop.f32.mrf.mxu0
        %v802 = vadd.f32 0.0, %v801
        %v803 = vpop.f32.mrf.mxu0
        %804 = vmatprep.mubr.bf16.mxu0 0
        %805 = vmatmul.mubr.bf16.gmra.mxu0 %v693
        %v806 = vpop.f32.mrf.mxu0
        %v807 = vadd.f32 0.0, %v806
        %v808 = vpop.f32.mrf.mxu0
        %v809 = vpop.f32.mrf.mxu0
        %v810 = vadd.f32 0.0, %v809
        %v811 = vpop.f32.mrf.mxu0
        %812 = vmatprep.mubr.bf16.mxu0 0
        %813 = vmatmul.mubr.bf16.gmra.mxu0 %v694
        %v814 = vpop.f32.mrf.mxu0
        %v815 = vadd.f32 0.0, %v814
        %v816 = vpop.f32.mrf.mxu0
        %v817 = vpop.f32.mrf.mxu0
        %v818 = vadd.f32 0.0, %v817
        %v819 = vpop.f32.mrf.mxu0
        %820 = vmatprep.mubr.bf16.mxu0 0
        %821 = vmatmul.mubr.bf16.gmra.mxu0 %v695
        %v822 = vpop.f32.mrf.mxu0
        %v823 = vadd.f32 0.0, %v822
        %v824 = vpop.f32.mrf.mxu0
        %v825 = vpop.f32.mrf.mxu0
        %v826 = vadd.f32 0.0, %v825
        %v827 = vpop.f32.mrf.mxu0
        %828 = vmatprep.mubr.bf16.mxu0 0
        %829 = vmatmul.mubr.bf16.gmra.mxu0 %v696
        %v830 = vpop.f32.mrf.mxu0
        %v831 = vadd.f32 0.0, %v830
        %v832 = vpop.f32.mrf.mxu0
        %v833 = vpop.f32.mrf.mxu0
        %v834 = vadd.f32 0.0, %v833
        %v835 = vpop.f32.mrf.mxu0
        %836 = vmatprep.mubr.bf16.mxu0 0
        %837 = vmatmul.mubr.bf16.gmra.mxu0 %v697
        %v838 = vpop.f32.mrf.mxu0
        %v839 = vadd.f32 0.0, %v838
        %v840 = vpop.f32.mrf.mxu0
        %v841 = vpop.f32.mrf.mxu0
        %v842 = vadd.f32 0.0, %v841
        %v843 = vpop.f32.mrf.mxu0
        %844 = vmatprep.mubr.bf16.mxu0 0
        %845 = vmatmul.mubr.bf16.gmra.mxu0 %v698
        %v846 = vpop.f32.mrf.mxu0
        %v847 = vadd.f32 0.0, %v846
        %v848 = vpop.f32.mrf.mxu0
        %v849 = vpop.f32.mrf.mxu0
        %v850 = vadd.f32 0.0, %v849
        %v851 = vpop.f32.mrf.mxu0
        %852 = vmatprep.mubr.bf16.mxu0 0
        %853 = vmatmul.mubr.bf16.gmra.mxu0 %v699
        %v854 = vpop.f32.mrf.mxu0
        %v855 = vadd.f32 0.0, %v854
        %v856 = vpop.f32.mrf.mxu0
        %v857 = vpop.f32.mrf.mxu0
        %v858 = vadd.f32 0.0, %v857
        %v859 = vpop.f32.mrf.mxu0
        %860 = vdwg.mxu0
        %v861 = vadd.f32 %v676, %v799
        %v862 = vadd.f32 %v677, %v802
        %v863 = vadd.f32 %v678, %v807
        %v864 = vadd.f32 %v679, %v810
        %v865 = vadd.f32 %v680, %v815
        %v866 = vadd.f32 %v681, %v818
        %v867 = vadd.f32 %v682, %v823
        %v868 = vadd.f32 %v683, %v826
        %v869 = vadd.f32 %v684, %v831
        %v870 = vadd.f32 %v685, %v834
        %v871 = vadd.f32 %v686, %v839
        %v872 = vadd.f32 %v687, %v842
        %v873 = vadd.f32 %v688, %v847
        %v874 = vadd.f32 %v689, %v850
        %v875 = vadd.f32 %v690, %v855
        %v876 = vadd.f32 %v691, %v858
        %877 = vst [vmem:[#allocation2] sm:$0xff] %v861
        %878 = vst [vmem:[#allocation2 + $0x8] sm:$0xff] %v862
        %879 = vst [vmem:[#allocation2 + $0x10] sm:$0xff] %v863
        %880 = vst [vmem:[#allocation2 + $0x18] sm:$0xff] %v864
        %881 = vst [vmem:[#allocation2 + $0x20] sm:$0xff] %v865
        %882 = vst [vmem:[#allocation2 + $0x28] sm:$0xff] %v866
        %883 = vst [vmem:[#allocation2 + $0x30] sm:$0xff] %v867
        %884 = vst [vmem:[#allocation2 + $0x38] sm:$0xff] %v868
        %885 = vst [vmem:[#allocation2 + $0x40] sm:$0xff] %v869
        %886 = vst [vmem:[#allocation2 + $0x48] sm:$0xff] %v870
        %887 = vst [vmem:[#allocation2 + $0x50] sm:$0xff] %v871
        %888 = vst [vmem:[#allocation2 + $0x58] sm:$0xff] %v872
        %889 = vst [vmem:[#allocation2 + $0x60] sm:$0xff] %v873
        %890 = vst [vmem:[#allocation2 + $0x68] sm:$0xff] %v874
        %891 = vst [vmem:[#allocation2 + $0x70] sm:$0xff] %v875
        %892 = vst [vmem:[#allocation2 + $0x78] sm:$0xff] %v876
        %p893 = scmp.eq.s32.totalorder %s35, 1
        // Predicated region
        $region61: #{tpu_custom_call.1} parent=39 // pred_check
          %p894 = pneg %p893
        $region62: #{tpu_custom_call.1} parent=39 // pred_check_branch
          %896 = sbr.rel (%p894) target = $region64
        $region63: #{tpu_custom_call.1} parent=39 // pred_region
          %v897 = vld [vmem:[#allocation2] sm:$0xff]
          %v898 = vld [vmem:[#allocation2 + $0x8] sm:$0xff]
          %v899 = vld [vmem:[#allocation2 + $0x10] sm:$0xff]
          %v900 = vld [vmem:[#allocation2 + $0x18] sm:$0xff]
          %v901 = vld [vmem:[#allocation2 + $0x20] sm:$0xff]
          %v902 = vld [vmem:[#allocation2 + $0x28] sm:$0xff]
          %v903 = vld [vmem:[#allocation2 + $0x30] sm:$0xff]
          %v904 = vld [vmem:[#allocation2 + $0x38] sm:$0xff]
          %v905 = vld [vmem:[#allocation2 + $0x40] sm:$0xff]
          %v906 = vld [vmem:[#allocation2 + $0x48] sm:$0xff]
          %v907 = vld [vmem:[#allocation2 + $0x50] sm:$0xff]
          %v908 = vld [vmem:[#allocation2 + $0x58] sm:$0xff]
          %v909 = vld [vmem:[#allocation2 + $0x60] sm:$0xff]
          %v910 = vld [vmem:[#allocation2 + $0x68] sm:$0xff]
          %v911 = vld [vmem:[#allocation2 + $0x70] sm:$0xff]
          %v912 = vld [vmem:[#allocation2 + $0x78] sm:$0xff]
          %v913 = vld [vmem:[%s405] sm:$0x1]
          %v915 = vlaneseq
          %v916 = vshrl.u32 %v915, 7
          %v917 = vsub.s32 0, %v916
          %v918 = vrot.slane %v913, %v917
          %v920 = vadd.f32 %v897, %v918
          %v921 = vadd.f32 %v898, %v918
          %v922 = vadd.f32 %v899, %v918
          %v923 = vadd.f32 %v900, %v918
          %v924 = vadd.f32 %v901, %v918
          %v925 = vadd.f32 %v902, %v918
          %v926 = vadd.f32 %v903, %v918
          %v927 = vadd.f32 %v904, %v918
          %v928 = vadd.f32 %v905, %v918
          %v929 = vadd.f32 %v906, %v918
          %v930 = vadd.f32 %v907, %v918
          %v931 = vadd.f32 %v908, %v918
          %v932 = vadd.f32 %v909, %v918
          %v933 = vadd.f32 %v910, %v918
          %v934 = vadd.f32 %v911, %v918
          %v935 = vadd.f32 %v912, %v918
          %936 = vst [vmem:[%s400] sm:$0xff] %v920
          %937 = vst [vmem:[%s400 + $0x8] sm:$0xff] %v921
          %938 = vst [vmem:[%s400 + $0x10] sm:$0xff] %v922
          %939 = vst [vmem:[%s400 + $0x18] sm:$0xff] %v923
          %940 = vst [vmem:[%s400 + $0x20] sm:$0xff] %v924
          %941 = vst [vmem:[%s400 + $0x28] sm:$0xff] %v925
          %942 = vst [vmem:[%s400 + $0x30] sm:$0xff] %v926
          %943 = vst [vmem:[%s400 + $0x38] sm:$0xff] %v927
          %944 = vst [vmem:[%s400 + $0x40] sm:$0xff] %v928
          %945 = vst [vmem:[%s400 + $0x48] sm:$0xff] %v929
          %946 = vst [vmem:[%s400 + $0x50] sm:$0xff] %v930
          %947 = vst [vmem:[%s400 + $0x58] sm:$0xff] %v931
          %948 = vst [vmem:[%s400 + $0x60] sm:$0xff] %v932
          %949 = vst [vmem:[%s400 + $0x68] sm:$0xff] %v933
          %950 = vst [vmem:[%s400 + $0x70] sm:$0xff] %v934
          %951 = vst [vmem:[%s400 + $0x78] sm:$0xff] %v935
        $region64: #{tpu_custom_call.1} parent=39 // pred_fallthru
          _
        %s952 = sand.u32 %s195, 1
        %s953 = scalar_lea.sflag [#allocation5], %s952
        %s954 = sand.u32 %s195, 1
        %s955 = smul.addr %s954, 128
        %s956 = scalar_lea.vmem [#allocation11], %s955
        // Predicated region
        $region65: #{tpu_custom_call.1} parent=39 // pred_check
          %p957 = pneg %p205
        $region66: #{tpu_custom_call.1} parent=39 // pred_check_branch
          %959 = sbr.rel (%p957) target = $region68
        $region67: #{tpu_custom_call.1} parent=39 // pred_region
          %s960 = smul.u32 16, %s34
          %s962 = ssub.s32 2048, 2048
          %963 = vsyncadd %s953, %s962
          %s964 = smul.addr %s33, 16
          %s965 = sadd.s32 %s960, %s964
          %s966 = smul.addr %s965, 128
          %s967 = scalar_lea.hbm %s5, %s966
          %s968 = sshll.u32 %s956, 4
          %s969 = int_to_ptr.vmem [resolvable:$true] %s968
          %974 = dma.vmem_to_hbm [thread:$0]  %s969, 2048, %s967, %s953, 128, 128, 8
        $region68: #{tpu_custom_call.1} parent=39 // pred_fallthru
          _
      $region40: #{tpu_custom_call.1} parent=5 // pred_fallthru
        _
      %p975 = scmp.le.s32.totalorder 2, %s23
      // Predicated region
      $region69: #{tpu_custom_call.1} parent=5 // pred_check
        %p976 = pneg %p975
      $region70: #{tpu_custom_call.1} parent=5 // pred_check_branch
        %978 = sbr.rel (%p976) target = $region72
      $region71: #{tpu_custom_call.1} parent=5 // pred_region
        %s979 = ssub.s32 %s23, 2
        // Predicated region
        $region73: #{tpu_custom_call.1} parent=71 // pred_check
          %p980 = pneg %p211
        $region74: #{tpu_custom_call.1} parent=71 // pred_check_branch
          %982 = sbr.rel (%p980) target = $region76
        $region75: #{tpu_custom_call.1} parent=71 // pred_region
          %s983 = sand.u32 %s196, 1
          %s984 = scalar_lea.sflag [#allocation5], %s983
          %s985 = sand.u32 %s196, 1
          %s986 = smul.addr %s985, 128
          %s987 = scalar_lea.vmem [#allocation11], %s986
          %988 = dma.done %s984, 2048
        $region76: #{tpu_custom_call.1} parent=71 // pred_fallthru
          _
      $region72: #{tpu_custom_call.1} parent=5 // pred_fallthru
        _
    $region6: #{tpu_custom_call.1} parent=1 // loop_footer
      %s27 = sadd.s32 1, %s23
    $region7: #{tpu_custom_call.1} parent=1 // loop_footer_branch
      %22 = sbr.rel target = $region3
    $region8: #{tpu_custom_call.1} parent=1 // loop_exit
      _
    %989 = vsyncpa [#allocation4], 1
    %s990 = scalar_lea.sflag [#allocation4], 1
    %991 = vsyncpa %s990, 1
    %992 = vsyncpa [#allocation7], 1
    %s993 = scalar_lea.sflag [#allocation7], 1
    %994 = vsyncpa %s993, 1
    %995 = vsyncpa [#allocation10], 1
    %s996 = scalar_lea.sflag [#allocation10], 1
    %997 = vsyncpa %s996, 1
    %998 = vsyncpa [#allocation5], 1
    %s999 = scalar_lea.sflag [#allocation5], 1
    %1000 = vsyncpa %s999, 1

</llo_original>
